<compile_context>
chip_gen: v6e
topology: v6e:2x2x1
jax: 0.10.0
libtpu: 0.0.40
codegen_flags: <defaults>
</compile_context>

<pallas_src>
import functools

import jax
import jax.numpy as jnp
from jax.experimental import pallas as pl
from jax.experimental.pallas import tpu as pltpu


def decoder_kernel(x_ref, w1_ref, b1_ref, w2_ref, b2_ref, w3_ref, b3_ref, o_ref):
    """Fused 3-layer MLP on one batch tile (MXU matmuls + EUP tanh)."""
    h1 = jnp.tanh(
        jnp.dot(x_ref[...], w1_ref[...], preferred_element_type=jnp.float32)
        + b1_ref[...]
    )
    h2 = jnp.tanh(
        jnp.dot(h1, w2_ref[...], preferred_element_type=jnp.float32)
        + b2_ref[...]
    )
    o_ref[...] = (
        jnp.dot(h2, w3_ref[...], preferred_element_type=jnp.float32)
        + b3_ref[...]
    ).astype(o_ref.dtype)


def _round_up(x, m):
    return ((x + m - 1) // m) * m


def _vmem_budget_bytes():
    """Conservative per-call VMEM budget for activation tiles, generation-aware."""
    try:
        cap = pltpu.get_tpu_info().vmem_capacity_bytes  # 64 MiB on v7x, 128 MiB v5e/v6e
        return max(min(cap // 4, 24 * 1024 * 1024), 4 * 1024 * 1024)
    except Exception:  # pragma: no cover - CPU interpret / older runtimes
        return 16 * 1024 * 1024  # fits the default scoped-VMEM limit everywhere


def _choose_batch_tile(batch, latent_dim, out_dim, budget_bytes):
    # Per-row f32 footprint: double-buffered x & out tiles + h1/h2 intermediates.
    per_row = 4 * (2 * latent_dim + 32 + 128 + 2 * out_dim)
    tb = budget_bytes // per_row
    tb = max(256, (tb // 256) * 256)      # multiple of the MXU M dim
    tb = min(tb, 8192)                    # diminishing returns past this
    tb = min(tb, _round_up(batch, 8))     # don't pad tiny batches to huge tiles
    return max(tb, 8)


def decoder_forward(x, params, *, tb=None):
    """x: (B, latent_dim) float32. params: dict of pre-transposed weights/biases."""
    w1, b1, w2, b2, w3, b3 = (
        params["w1"], params["b1"], params["w2"], params["b2"],
        params["w3"], params["b3"],
    )
    B, latent_dim = x.shape
    out_dim = w3.shape[1]

    if tb is None:
        tb = _choose_batch_tile(B, latent_dim, out_dim, _vmem_budget_bytes())
    tb = max(8, _round_up(int(tb), 8))      # sublane-aligned batch tile
    tb = min(tb, _round_up(B, 8))

    b_padded = _round_up(B, tb)
    if b_padded != B:
        x = jnp.pad(x, ((0, b_padded - B), (0, 0)))
    n_tiles = b_padded // tb

    # Weights / biases: constant index map -> DMA'd once, resident in VMEM.
    resident = lambda a: pl.BlockSpec(a.shape, lambda i: (0,) * a.ndim)

    flops = 2 * B * (latent_dim * 32 + 32 * 128 + 128 * out_dim)
    param_elems = w1.size + b1.size + w2.size + b2.size + w3.size + b3.size
    cost = pl.CostEstimate(
        flops=flops,
        transcendentals=B * (32 + 128),
        bytes_accessed=4 * (B * latent_dim + B * out_dim + param_elems),
    )

    out = pl.pallas_call(
        decoder_kernel,
        out_shape=jax.ShapeDtypeStruct((b_padded, out_dim), jnp.float32),
        grid=(n_tiles,),
        in_specs=[
            pl.BlockSpec((tb, latent_dim), lambda i: (i, 0)),
            resident(w1), resident(b1),
            resident(w2), resident(b2),
            resident(w3), resident(b3),
        ],
        out_specs=pl.BlockSpec((tb, out_dim), lambda i: (i, 0)),
        compiler_params=pltpu.CompilerParams(
            dimension_semantics=("parallel",),       # megacore sharding on v7x
            vmem_limit_bytes=32 * 1024 * 1024,       # <= physical on all gens
        ),
        cost_estimate=cost,
    )(x, w1, b1, w2, b2, w3, b3)

    if b_padded != B:
        out = out[:B]
    return out


def init_decoder_params(key, latent_dim, out_dim):
    """Deterministic init mirroring nn.Linear.

    PyTorch Linear stores weight as (out, in) and computes x @ W.T + b; we keep
    the transposed (in, out) layout so the kernel does x @ W + b.  Biases are
    kept 2-D (1, out) for a clean sublane broadcast on TPU.
    """
    ks = jax.random.split(key, 6)

    def linear(kw, kb, fan_in, fan_out):
        bound = 1.0 / jnp.sqrt(fan_in)
        w = jax.random.uniform(kw, (fan_in, fan_out), jnp.float32, -bound, bound)
        b = jax.random.uniform(kb, (1, fan_out), jnp.float32, -bound, bound)
        return w, b

    w1, b1 = linear(ks[0], ks[1], latent_dim, 32)
    w2, b2 = linear(ks[2], ks[3], 32, 128)
    w3, b3 = linear(ks[4], ks[5], 128, out_dim)
    return dict(w1=w1, b1=b1, w2=w2, b2=b2, w3=w3, b3=b3)


def decoder_reference(x, params):
    h = jnp.tanh(x @ params["w1"] + params["b1"])
    h = jnp.tanh(h @ params["w2"] + params["b2"])
    return h @ params["w3"] + params["b3"]


if __name__ == "__main__":
    latent_dim, out_dim, batch = 16, 64, 8
    key = jax.random.PRNGKey(0)
    k_param, k_x, k_x2 = jax.random.split(key, 3)

    params = init_decoder_params(k_param, latent_dim, out_dim)

    # Small toy batch (auto-selected tile, single grid step).
    x = jax.random.normal(k_x, (batch, latent_dim), jnp.float32)
    out = jax.block_until_ready(jax.jit(decoder_forward)(x, params))
    ref = decoder_reference(x, params)
    assert out.shape == (batch, out_dim)
    assert jnp.allclose(out, ref, atol=1e-5, rtol=1e-5), "mismatch vs reference (B=8)"

    # Larger, non-tile-multiple batch to exercise the grid + padding path.
    batch2 = 300
    x2 = jax.random.normal(k_x2, (batch2, latent_dim), jnp.float32)
    fwd_tiled = jax.jit(functools.partial(decoder_forward, tb=128))
    out2 = jax.block_until_ready(fwd_tiled(x2, params))
    ref2 = decoder_reference(x2, params)
    assert out2.shape == (batch2, out_dim)
    assert jnp.allclose(out2, ref2, atol=1e-5, rtol=1e-5), "mismatch vs reference (B=300)"

    print("KERNEL_OK")
</pallas_src>

<mosaic_0001>
module attributes {stable_mosaic.version = 11 : i64} {
  func.func @decoder_kernel(%arg0: i32, %arg1: memref<8x16xf32, #tpu.memory_space<vmem>>, %arg2: memref<16x32xf32, #tpu.memory_space<vmem>>, %arg3: memref<1x32xf32, #tpu.memory_space<vmem>>, %arg4: memref<32x128xf32, #tpu.memory_space<vmem>>, %arg5: memref<1x128xf32, #tpu.memory_space<vmem>>, %arg6: memref<128x64xf32, #tpu.memory_space<vmem>>, %arg7: memref<1x64xf32, #tpu.memory_space<vmem>>, %arg8: memref<8x64xf32, #tpu.memory_space<vmem>>) attributes {dimension_semantics = [#tpu.dimension_semantics<parallel>], iteration_bounds = array<i64: 1>, scalar_prefetch = 0 : i64, scratch_operands = 0 : i64, tpu.core_type = #tpu.core_type<tc>, window_params = [{transform_indices = @transform_0, window_bounds = array<i64: 8, 16>}, {pipeline_mode = #tpu.pipeline_mode<synchronous>, transform_indices = @transform_1, window_bounds = array<i64: 16, 32>}, {pipeline_mode = #tpu.pipeline_mode<synchronous>, transform_indices = @transform_2, window_bounds = array<i64: 1, 32>}, {pipeline_mode = #tpu.pipeline_mode<synchronous>, transform_indices = @transform_3, window_bounds = array<i64: 32, 128>}, {pipeline_mode = #tpu.pipeline_mode<synchronous>, transform_indices = @transform_4, window_bounds = array<i64: 1, 128>}, {pipeline_mode = #tpu.pipeline_mode<synchronous>, transform_indices = @transform_5, window_bounds = array<i64: 128, 64>}, {pipeline_mode = #tpu.pipeline_mode<synchronous>, transform_indices = @transform_6, window_bounds = array<i64: 1, 64>}, {transform_indices = @transform_7, window_bounds = array<i64: 8, 64>}]} {
    %c0 = arith.constant 0 : index
    %c0_0 = arith.constant 0 : index
    %0 = vector.load %arg1[%c0, %c0_0] : memref<8x16xf32, #tpu.memory_space<vmem>>, vector<8x16xf32>
    %c0_1 = arith.constant 0 : index
    %c0_2 = arith.constant 0 : index
    %1 = vector.load %arg2[%c0_1, %c0_2] : memref<16x32xf32, #tpu.memory_space<vmem>>, vector<16x32xf32>
    %cst = arith.constant dense<0.000000e+00> : vector<8x32xf32>
    %2 = tpu.matmul %0, %1, %cst {dimension_numbers = #tpu.dot_dimension_numbers<[1], [0], [0], [1], [0, 0, 1, 1], [], []>} : vector<8x16xf32>, vector<16x32xf32>, vector<8x32xf32> -> vector<8x32xf32>
    %c0_3 = arith.constant 0 : index
    %c0_4 = arith.constant 0 : index
    %3 = vector.load %arg3[%c0_3, %c0_4] : memref<1x32xf32, #tpu.memory_space<vmem>>, vector<1x32xf32>
    %4 = vector.broadcast %3 : vector<1x32xf32> to vector<8x32xf32>
    %5 = arith.addf %2, %4 : vector<8x32xf32>
    %6 = math.tanh %5 : vector<8x32xf32>
    %c0_5 = arith.constant 0 : index
    %c0_6 = arith.constant 0 : index
    %7 = vector.load %arg4[%c0_5, %c0_6] : memref<32x128xf32, #tpu.memory_space<vmem>>, vector<32x128xf32>
    %cst_7 = arith.constant dense<0.000000e+00> : vector<8x128xf32>
    %8 = tpu.matmul %6, %7, %cst_7 {dimension_numbers = #tpu.dot_dimension_numbers<[1], [0], [0], [1], [0, 0, 1, 1], [], []>} : vector<8x32xf32>, vector<32x128xf32>, vector<8x128xf32> -> vector<8x128xf32>
    %c0_8 = arith.constant 0 : index
    %c0_9 = arith.constant 0 : index
    %9 = vector.load %arg5[%c0_8, %c0_9] : memref<1x128xf32, #tpu.memory_space<vmem>>, vector<1x128xf32>
    %10 = vector.broadcast %9 : vector<1x128xf32> to vector<8x128xf32>
    %11 = arith.addf %8, %10 : vector<8x128xf32>
    %12 = math.tanh %11 : vector<8x128xf32>
    %c0_10 = arith.constant 0 : index
    %c0_11 = arith.constant 0 : index
    %13 = vector.load %arg6[%c0_10, %c0_11] : memref<128x64xf32, #tpu.memory_space<vmem>>, vector<128x64xf32>
    %cst_12 = arith.constant dense<0.000000e+00> : vector<8x64xf32>
    %14 = tpu.matmul %12, %13, %cst_12 {dimension_numbers = #tpu.dot_dimension_numbers<[1], [0], [0], [1], [0, 0, 1, 1], [], []>} : vector<8x128xf32>, vector<128x64xf32>, vector<8x64xf32> -> vector<8x64xf32>
    %c0_13 = arith.constant 0 : index
    %c0_14 = arith.constant 0 : index
    %15 = vector.load %arg7[%c0_13, %c0_14] : memref<1x64xf32, #tpu.memory_space<vmem>>, vector<1x64xf32>
    %16 = vector.broadcast %15 : vector<1x64xf32> to vector<8x64xf32>
    %17 = arith.addf %14, %16 : vector<8x64xf32>
    %c0_15 = arith.constant 0 : index
    %c0_16 = arith.constant 0 : index
    %18 = vector.load %arg8[%c0_15, %c0_16] : memref<8x64xf32, #tpu.memory_space<vmem>>, vector<8x64xf32>
    tpu.vector_store %arg8[%c0_15, %c0_16], %17 {strides = array<i32>} : memref<8x64xf32, #tpu.memory_space<vmem>>, vector<8x64xf32>,
    return
  }
  func.func @transform_0(%arg0: i32) -> (i32, i32) {
    %c0_i32 = arith.constant 0 : i32
    %c0_i32_0 = arith.constant 0 : i32
    return %arg0, %c0_i32 : i32, i32
  }
  func.func @transform_1(%arg0: i32) -> (i32, i32) {
    %c0_i32 = arith.constant 0 : i32
    %c0_i32_0 = arith.constant 0 : i32
    %c0_i32_1 = arith.constant 0 : i32
    return %c0_i32, %c0_i32_0 : i32, i32
  }
  func.func @transform_2(%arg0: i32) -> (i32, i32) {
    %c0_i32 = arith.constant 0 : i32
    %c0_i32_0 = arith.constant 0 : i32
    %c0_i32_1 = arith.constant 0 : i32
    return %c0_i32, %c0_i32_0 : i32, i32
  }
  func.func @transform_3(%arg0: i32) -> (i32, i32) {
    %c0_i32 = arith.constant 0 : i32
    %c0_i32_0 = arith.constant 0 : i32
    %c0_i32_1 = arith.constant 0 : i32
    return %c0_i32, %c0_i32_0 : i32, i32
  }
  func.func @transform_4(%arg0: i32) -> (i32, i32) {
    %c0_i32 = arith.constant 0 : i32
    %c0_i32_0 = arith.constant 0 : i32
    %c0_i32_1 = arith.constant 0 : i32
    return %c0_i32, %c0_i32_0 : i32, i32
  }
  func.func @transform_5(%arg0: i32) -> (i32, i32) {
    %c0_i32 = arith.constant 0 : i32
    %c0_i32_0 = arith.constant 0 : i32
    %c0_i32_1 = arith.constant 0 : i32
    return %c0_i32, %c0_i32_0 : i32, i32
  }
  func.func @transform_6(%arg0: i32) -> (i32, i32) {
    %c0_i32 = arith.constant 0 : i32
    %c0_i32_0 = arith.constant 0 : i32
    %c0_i32_1 = arith.constant 0 : i32
    return %c0_i32, %c0_i32_0 : i32, i32
  }
  func.func @transform_7(%arg0: i32) -> (i32, i32) {
    %c0_i32 = arith.constant 0 : i32
    %c0_i32_0 = arith.constant 0 : i32
    return %arg0, %c0_i32 : i32, i32
  }
}

</mosaic_0001>

<llo_original>
// kernel: decoder_forward.1
$region0: #{decoder_forward.1}
  #allocation0 [shape = 'u32[]', space=smem, size = 0x4, offset = 0x4, fixed_abs, tag = 'smem constant byte address 0x4 - core index']
  #allocation1 [shape = 'u32[144,128]{1,0:T(1,128)}', space=vmem, size = 0x12000, scoped, tag = 'internal scratch']
  %s0 = inlined_call_operand.vmem [shape: f32[8,16], index: 0, kind: input, shape index: {}]
  %s1 = inlined_call_operand.vmem [shape: f32[16,32], index: 1, kind: input, shape index: {}]
  %s2 = inlined_call_operand.vmem [shape: f32[1,32], index: 2, kind: input, shape index: {}]
  %s3 = inlined_call_operand.vmem [shape: f32[32,128], index: 3, kind: input, shape index: {}]
  %s4 = inlined_call_operand.vmem [shape: f32[1,128], index: 4, kind: input, shape index: {}]
  %s5 = inlined_call_operand.vmem [shape: f32[128,64], index: 5, kind: input, shape index: {}]
  %s6 = inlined_call_operand.vmem [shape: f32[1,64], index: 6, kind: input, shape index: {}]
  %s7 = inlined_call_operand.hbm [shape: f32[8,64], index: 7, kind: output, shape index: {}]
  %s8 = sld [smem:[#allocation0]]
  $region38: #{decoder_forward.1} parent=0
    _
  %s10 = ssub.s32 1, %s8
  %s11 = scalar_select 0, %s10, %s8
  $region1: #{decoder_forward.1} parent=0
    #allocation2 [shape = 'u8[4096]{0}', space=vmem, size = 0x1000, scoped, tag = 'output window, operand 0, single buffered']
    #allocation3 [shape = 's32[1]{0}', space=sflag, size = 0x4, scoped, tag = 'scoped memory for decoder_forward.1']
    %12 = vsyncpa [#allocation3], 0
    // Predicated region
    $region2: #{decoder_forward.1} parent=1 // pred_check
      _
    $region3: #{decoder_forward.1} parent=1 // pred_check_branch
      %14 = sbr.rel (0) target = $region5
    $region4: #{decoder_forward.1} parent=1 // pred_region
      _
    $region5: #{decoder_forward.1} parent=1 // pred_fallthru
      _
    // Predicated region
    $region6: #{decoder_forward.1} parent=1 // pred_check
      _
    $region7: #{decoder_forward.1} parent=1 // pred_check_branch
      %16 = sbr.rel (0) target = $region9
    $region8: #{decoder_forward.1} parent=1 // pred_region
      _
    $region9: #{decoder_forward.1} parent=1 // pred_fallthru
      _
    // Predicated region
    $region10: #{decoder_forward.1} parent=1 // pred_check
      _
    $region11: #{decoder_forward.1} parent=1 // pred_check_branch
      %18 = sbr.rel (0) target = $region13
    $region12: #{decoder_forward.1} parent=1 // pred_region
      _
    $region13: #{decoder_forward.1} parent=1 // pred_fallthru
      _
    // Predicated region
    $region14: #{decoder_forward.1} parent=1 // pred_check
      _
    $region15: #{decoder_forward.1} parent=1 // pred_check_branch
      %20 = sbr.rel (0) target = $region17
    $region16: #{decoder_forward.1} parent=1 // pred_region
      _
    $region17: #{decoder_forward.1} parent=1 // pred_fallthru
      _
    // Predicated region
    $region18: #{decoder_forward.1} parent=1 // pred_check
      _
    $region19: #{decoder_forward.1} parent=1 // pred_check_branch
      %22 = sbr.rel (0) target = $region21
    $region20: #{decoder_forward.1} parent=1 // pred_region
      _
    $region21: #{decoder_forward.1} parent=1 // pred_fallthru
      _
    // Predicated region
    $region22: #{decoder_forward.1} parent=1 // pred_check
      _
    $region23: #{decoder_forward.1} parent=1 // pred_check_branch
      %24 = sbr.rel (0) target = $region25
    $region24: #{decoder_forward.1} parent=1 // pred_region
      _
    $region25: #{decoder_forward.1} parent=1 // pred_fallthru
      _
    // Predicated region
    $region26: #{decoder_forward.1} parent=1 // pred_check
      _
    $region27: #{decoder_forward.1} parent=1 // pred_check_branch
      %26 = sbr.rel (0) target = $region29
    $region28: #{decoder_forward.1} parent=1 // pred_region
      _
    $region29: #{decoder_forward.1} parent=1 // pred_fallthru
      _
    %v27 = vld [vmem:[%s0] sm:$0xff]
    %v28 = vld [vmem:[%s1] sm:$0xff]
    %v29 = vld [vmem:[%s1 + $0x8] sm:$0xff]
    %v30 = vld [vmem:[%s2] sm:$0x1]
    %v32 = vlaneseq
    %v33 = vshrl.u32 %v32, 7
    %v34 = vsub.s32 0, %v33
    %v35 = vrot.slane %v30, %v34
    %vm37 = vcmask 130048
    %v39 = vsel %vm37, %v27, 0
    %41 = vmatprep.subr.mxu0 0.0
    %42 = vmatpush1.msra.mxu0 0.0
    %43 = vmatprep.subr.mxu0 0.0
    %44 = vmatpush1.msra.mxu0 0.0
    %45 = vmatprep.subr.mxu0 0.0
    %46 = vmatpush1.msra.mxu0 0.0
    %47 = vmatprep.subr.mxu0 0.0
    %48 = vmatpush1.msra.mxu0 0.0
    %49 = vmatprep.subr.mxu0 0.0
    %50 = vmatpush1.msra.mxu0 0.0
    %51 = vmatprep.subr.mxu0 0.0
    %52 = vmatpush1.msra.mxu0 0.0
    %53 = vmatprep.subr.mxu0 0.0
    %54 = vmatpush1.msra.mxu0 0.0
    %55 = vmatprep.subr.mxu0 0.0
    %56 = vmatpush1.msra.mxu0 0.0
    %57 = vmatprep.subr.mxu0 0.0
    %58 = vmatpush1.msra.mxu0 0.0
    %59 = vmatprep.subr.mxu0 0.0
    %60 = vmatpush1.msra.mxu0 0.0
    %61 = vmatprep.subr.mxu0 0.0
    %62 = vmatpush1.msra.mxu0 0.0
    %63 = vmatprep.subr.mxu0 0.0
    %64 = vmatpush1.msra.mxu0 0.0
    %65 = vmatprep.subr.mxu0 0.0
    %66 = vmatpush1.msra.mxu0 0.0
    %67 = vmatprep.subr.mxu0 0.0
    %68 = vmatpush1.msra.mxu0 0.0
    %69 = vmatprep.subr.mxu0 0.0
    %70 = vmatpush1.msra.mxu0 %v29
    %71 = vmatprep.subr.mxu0 0.0
    %72 = vmatpush1.msra.mxu0 %v28
    %73 = vmatprep.subr.mxu0 0.0
    %74 = vmatpush2.msra.mxu0 0.0
    %75 = vmatprep.subr.mxu0 0.0
    %76 = vmatpush2.msra.mxu0 0.0
    %77 = vmatprep.subr.mxu0 0.0
    %78 = vmatpush2.msra.mxu0 0.0
    %79 = vmatprep.subr.mxu0 0.0
    %80 = vmatpush2.msra.mxu0 0.0
    %81 = vmatprep.subr.mxu0 0.0
    %82 = vmatpush2.msra.mxu0 0.0
    %83 = vmatprep.subr.mxu0 0.0
    %84 = vmatpush2.msra.mxu0 0.0
    %85 = vmatprep.subr.mxu0 0.0
    %86 = vmatpush2.msra.mxu0 0.0
    %87 = vmatprep.subr.mxu0 0.0
    %88 = vmatpush2.msra.mxu0 0.0
    %89 = vmatprep.subr.mxu0 0.0
    %90 = vmatpush2.msra.mxu0 0.0
    %91 = vmatprep.subr.mxu0 0.0
    %92 = vmatpush2.msra.mxu0 0.0
    %93 = vmatprep.subr.mxu0 0.0
    %94 = vmatpush2.msra.mxu0 0.0
    %95 = vmatprep.subr.mxu0 0.0
    %96 = vmatpush2.msra.mxu0 0.0
    %97 = vmatprep.subr.mxu0 0.0
    %98 = vmatpush2.msra.mxu0 0.0
    %99 = vmatprep.subr.mxu0 0.0
    %100 = vmatpush2.msra.mxu0 0.0
    %101 = vmatprep.subr.mxu0 0.0
    %102 = vmatpush2.msra.mxu0 0.0
    %103 = vmatprep.subr.mxu0 0.0
    %104 = vmatpush2.msra.mxu0 0.0
    %105 = vmatprep.mubr.f32.mxu0 0.0
    %106 = vmatmul.mubr.f32.gmra.mxu0 %v39
    %v107 = vpop.f32.mrf.mxu0
    %v108 = vadd.f32 %v35, %v107
    %v109 = vpop.f32.mrf.mxu0
    %110 = vdwg.mxu0
    %v111 = vtanh.pop %v108
    %v112 = vld [vmem:[%s3] sm:$0xff]
    %v113 = vld [vmem:[%s3 + $0x8] sm:$0xff]
    %v114 = vld [vmem:[%s3 + $0x10] sm:$0xff]
    %v115 = vld [vmem:[%s3 + $0x18] sm:$0xff]
    %v116 = vld [vmem:[%s4] sm:$0x1]
    %v118 = vlaneseq
    %v119 = vshrl.u32 %v118, 7
    %v120 = vsub.s32 0, %v119
    %v121 = vrot.slane %v116, %v120
    %vm123 = vcmask 261120
    %v125 = vsel %vm123, %v111, 0
    %127 = vmatprep.subr.mxu0 0.0
    %128 = vmatpush1.msra.mxu0 0.0
    %129 = vmatprep.subr.mxu0 0.0
    %130 = vmatpush1.msra.mxu0 0.0
    %131 = vmatprep.subr.mxu0 0.0
    %132 = vmatpush1.msra.mxu0 0.0
    %133 = vmatprep.subr.mxu0 0.0
    %134 = vmatpush1.msra.mxu0 0.0
    %135 = vmatprep.subr.mxu0 0.0
    %136 = vmatpush1.msra.mxu0 0.0
    %137 = vmatprep.subr.mxu0 0.0
    %138 = vmatpush1.msra.mxu0 0.0
    %139 = vmatprep.subr.mxu0 0.0
    %140 = vmatpush1.msra.mxu0 0.0
    %141 = vmatprep.subr.mxu0 0.0
    %142 = vmatpush1.msra.mxu0 0.0
    %143 = vmatprep.subr.mxu0 0.0
    %144 = vmatpush1.msra.mxu0 0.0
    %145 = vmatprep.subr.mxu0 0.0
    %146 = vmatpush1.msra.mxu0 0.0
    %147 = vmatprep.subr.mxu0 0.0
    %148 = vmatpush1.msra.mxu0 0.0
    %149 = vmatprep.subr.mxu0 0.0
    %150 = vmatpush1.msra.mxu0 0.0
    %151 = vmatprep.subr.mxu0 0.0
    %152 = vmatpush1.msra.mxu0 %v115
    %153 = vmatprep.subr.mxu0 0.0
    %154 = vmatpush1.msra.mxu0 %v114
    %155 = vmatprep.subr.mxu0 0.0
    %156 = vmatpush1.msra.mxu0 %v113
    %157 = vmatprep.subr.mxu0 0.0
    %158 = vmatpush1.msra.mxu0 %v112
    %159 = vmatprep.subr.mxu0 0.0
    %160 = vmatpush2.msra.mxu0 0.0
    %161 = vmatprep.subr.mxu0 0.0
    %162 = vmatpush2.msra.mxu0 0.0
    %163 = vmatprep.subr.mxu0 0.0
    %164 = vmatpush2.msra.mxu0 0.0
    %165 = vmatprep.subr.mxu0 0.0
    %166 = vmatpush2.msra.mxu0 0.0
    %167 = vmatprep.subr.mxu0 0.0
    %168 = vmatpush2.msra.mxu0 0.0
    %169 = vmatprep.subr.mxu0 0.0
    %170 = vmatpush2.msra.mxu0 0.0
    %171 = vmatprep.subr.mxu0 0.0
    %172 = vmatpush2.msra.mxu0 0.0
    %173 = vmatprep.subr.mxu0 0.0
    %174 = vmatpush2.msra.mxu0 0.0
    %175 = vmatprep.subr.mxu0 0.0
    %176 = vmatpush2.msra.mxu0 0.0
    %177 = vmatprep.subr.mxu0 0.0
    %178 = vmatpush2.msra.mxu0 0.0
    %179 = vmatprep.subr.mxu0 0.0
    %180 = vmatpush2.msra.mxu0 0.0
    %181 = vmatprep.subr.mxu0 0.0
    %182 = vmatpush2.msra.mxu0 0.0
    %183 = vmatprep.subr.mxu0 0.0
    %184 = vmatpush2.msra.mxu0 0.0
    %185 = vmatprep.subr.mxu0 0.0
    %186 = vmatpush2.msra.mxu0 0.0
    %187 = vmatprep.subr.mxu0 0.0
    %188 = vmatpush2.msra.mxu0 0.0
    %189 = vmatprep.subr.mxu0 0.0
    %190 = vmatpush2.msra.mxu0 0.0
    %191 = vmatprep.mubr.f32.mxu0 0.0
    %192 = vmatmul.mubr.f32.gmra.mxu0 %v125
    %v193 = vpop.f32.mrf.mxu0
    %v194 = vadd.f32 %v121, %v193
    %v195 = vpop.f32.mrf.mxu0
    %196 = vdwg.mxu0
    %v197 = vtanh.pop %v194
    %v198 = vld [vmem:[%s5] sm:$0xff]
    %v199 = vld [vmem:[%s5 + $0x8] sm:$0xff]
    %v200 = vld [vmem:[%s5 + $0x10] sm:$0xff]
    %v201 = vld [vmem:[%s5 + $0x18] sm:$0xff]
    %v202 = vld [vmem:[%s5 + $0x20] sm:$0xff]
    %v203 = vld [vmem:[%s5 + $0x28] sm:$0xff]
    %v204 = vld [vmem:[%s5 + $0x30] sm:$0xff]
    %v205 = vld [vmem:[%s5 + $0x38] sm:$0xff]
    %v206 = vld [vmem:[%s5 + $0x40] sm:$0xff]
    %v207 = vld [vmem:[%s5 + $0x48] sm:$0xff]
    %v208 = vld [vmem:[%s5 + $0x50] sm:$0xff]
    %v209 = vld [vmem:[%s5 + $0x58] sm:$0xff]
    %v210 = vld [vmem:[%s5 + $0x60] sm:$0xff]
    %v211 = vld [vmem:[%s5 + $0x68] sm:$0xff]
    %v212 = vld [vmem:[%s5 + $0x70] sm:$0xff]
    %v213 = vld [vmem:[%s5 + $0x78] sm:$0xff]
    %v214 = vld [vmem:[%s6] sm:$0x1]
    %v216 = vlaneseq
    %v217 = vshrl.u32 %v216, 7
    %v218 = vsub.s32 0, %v217
    %v219 = vrot.slane %v214, %v218
    %221 = vmatprep.subr.mxu0 0.0
    %222 = vmatpush1.msra.mxu0 %v213
    %223 = vmatprep.subr.mxu0 0.0
    %224 = vmatpush1.msra.mxu0 %v212
    %225 = vmatprep.subr.mxu0 0.0
    %226 = vmatpush1.msra.mxu0 %v211
    %227 = vmatprep.subr.mxu0 0.0
    %228 = vmatpush1.msra.mxu0 %v210
    %229 = vmatprep.subr.mxu0 0.0
    %230 = vmatpush1.msra.mxu0 %v209
    %231 = vmatprep.subr.mxu0 0.0
    %232 = vmatpush1.msra.mxu0 %v208
    %233 = vmatprep.subr.mxu0 0.0
    %234 = vmatpush1.msra.mxu0 %v207
    %235 = vmatprep.subr.mxu0 0.0
    %236 = vmatpush1.msra.mxu0 %v206
    %237 = vmatprep.subr.mxu0 0.0
    %238 = vmatpush1.msra.mxu0 %v205
    %239 = vmatprep.subr.mxu0 0.0
    %240 = vmatpush1.msra.mxu0 %v204
    %241 = vmatprep.subr.mxu0 0.0
    %242 = vmatpush1.msra.mxu0 %v203
    %243 = vmatprep.subr.mxu0 0.0
    %244 = vmatpush1.msra.mxu0 %v202
    %245 = vmatprep.subr.mxu0 0.0
    %246 = vmatpush1.msra.mxu0 %v201
    %247 = vmatprep.subr.mxu0 0.0
    %248 = vmatpush1.msra.mxu0 %v200
    %249 = vmatprep.subr.mxu0 0.0
    %250 = vmatpush1.msra.mxu0 %v199
    %251 = vmatprep.subr.mxu0 0.0
    %252 = vmatpush1.msra.mxu0 %v198
    %253 = vmatprep.subr.mxu0 0.0
    %254 = vmatpush2.msra.mxu0 0.0
    %255 = vmatprep.subr.mxu0 0.0
    %256 = vmatpush2.msra.mxu0 0.0
    %257 = vmatprep.subr.mxu0 0.0
    %258 = vmatpush2.msra.mxu0 0.0
    %259 = vmatprep.subr.mxu0 0.0
    %260 = vmatpush2.msra.mxu0 0.0
    %261 = vmatprep.subr.mxu0 0.0
    %262 = vmatpush2.msra.mxu0 0.0
    %263 = vmatprep.subr.mxu0 0.0
    %264 = vmatpush2.msra.mxu0 0.0
    %265 = vmatprep.subr.mxu0 0.0
    %266 = vmatpush2.msra.mxu0 0.0
    %267 = vmatprep.subr.mxu0 0.0
    %268 = vmatpush2.msra.mxu0 0.0
    %269 = vmatprep.subr.mxu0 0.0
    %270 = vmatpush2.msra.mxu0 0.0
    %271 = vmatprep.subr.mxu0 0.0
    %272 = vmatpush2.msra.mxu0 0.0
    %273 = vmatprep.subr.mxu0 0.0
    %274 = vmatpush2.msra.mxu0 0.0
    %275 = vmatprep.subr.mxu0 0.0
    %276 = vmatpush2.msra.mxu0 0.0
    %277 = vmatprep.subr.mxu0 0.0
    %278 = vmatpush2.msra.mxu0 0.0
    %279 = vmatprep.subr.mxu0 0.0
    %280 = vmatpush2.msra.mxu0 0.0
    %281 = vmatprep.subr.mxu0 0.0
    %282 = vmatpush2.msra.mxu0 0.0
    %283 = vmatprep.subr.mxu0 0.0
    %284 = vmatpush2.msra.mxu0 0.0
    %285 = vmatprep.mubr.f32.mxu0 0.0
    %286 = vmatmul.mubr.f32.gmra.mxu0 %v197
    %v287 = vpop.f32.mrf.mxu0
    %v288 = vadd.f32 %v219, %v287
    %v289 = vpop.f32.mrf.mxu0
    %290 = vdwg.mxu0
    %vm291 = vcmask 523264
    %292 = vst.msk [vmem:[#allocation2] sm:$0xff] %vm291, %v288
    // Predicated region
    $region30: #{decoder_forward.1} parent=1 // pred_check
      _
    $region31: #{decoder_forward.1} parent=1 // pred_check_branch
      %294 = sbr.rel (0) target = $region33
    $region32: #{decoder_forward.1} parent=1 // pred_region
      %s296 = ssub.s32 128, 128
      %297 = vsyncadd [#allocation3], %s296
      %s299 = sshll.u32 [#allocation2], 4
      %s300 = int_to_ptr.vmem [resolvable:$true] %s299
      %302 = dma.vmem_to_hbm [thread:$0]  %s300, 128, %s7, [#allocation3]
    $region33: #{decoder_forward.1} parent=1 // pred_fallthru
      _
    // Predicated region
    $region34: #{decoder_forward.1} parent=1 // pred_check
      _
    $region35: #{decoder_forward.1} parent=1 // pred_check_branch
      %304 = sbr.rel (0) target = $region37
    $region36: #{decoder_forward.1} parent=1 // pred_region
      %305 = dma.done [#allocation3], 128
    $region37: #{decoder_forward.1} parent=1 // pred_fallthru
      _
    %306 = vsyncpa [#allocation3], 1

</llo_original>
